<compile_context>
chip_gen: v7x
topology: tpu7x:2x2x1
jax: 0.10.0
libtpu: 0.0.40
codegen_flags: <defaults>
</compile_context>

<pallas_src>
import functools

import jax
import jax.numpy as jnp
from jax.experimental import pallas as pl
from jax.experimental.pallas import tpu as pltpu


# ----------------------------------------------------------------------------
# Fused kernel: per-block partial sums for mel / velocity / L1 / gate terms.
# ----------------------------------------------------------------------------
def _sums_kernel(use_roll, mel_o_ref, mel_p_ref, mel_t_ref,
                 gate_o_ref, gate_t_ref, out_ref):
    """Blocks:
      mel_o/mel_p/mel_t : (Bt, C, T)     gate_o/gate_t : (Bt, 1, T)
      out               : (1, C, 128)    lane-dense partial-sum slab, columns:
          0: sum (mel_out  - tgt)^2        4: sum |mel_out  - tgt|
          1: sum (mel_post - tgt)^2        5: sum |mel_post - tgt|
          2: sum (d err_out)^2             6: sum |d err_out|
          3: sum (d err_post)^2            7: sum |d err_post|
          8: gate BCE-with-logits sum (same value replicated in every row)
        where d e = e[..., 1:] - e[..., :-1]  (== d(x) - d(tgt)); sums are
        taken over the Bt batch rows of this block and over time.
    """
    Bt, C, T = mel_t_ref.shape

    def rsum(v):                       # (Bt, C, T[-1]) -> (C, 1)
        return jnp.sum(jnp.sum(v, axis=2, keepdims=True), axis=0)

    def err_stats(x_ref):
        """Per-channel (sum e^2, sum d^2, sum |e|, sum |d|) for one error."""
        e = x_ref[...].astype(jnp.float32) - mel_t_ref[...].astype(jnp.float32)
        se = rsum(e * e)
        ae = rsum(jnp.abs(e))
        if T <= 1:                                   # degenerate (matches ref)
            z = jnp.zeros_like(se)
            return se, z, ae, z
        if use_roll:
            # Lane-aligned time dim: shift t+1 into lane t on the XLU and
            # zero the wrapped last column before reducing.
            t_idx = jax.lax.broadcasted_iota(jnp.int32, e.shape, 2)
            d = jnp.where(t_idx < (T - 1),
                          pltpu.roll(e, shift=-1, axis=2) - e, 0.0)
        else:
            d = e[:, :, 1:] - e[:, :, :-1]
        sd = rsum(d * d)
        ad = rsum(jnp.abs(d))
        return se, sd, ae, ad

    se0, sd0, ae0, ad0 = err_stats(mel_o_ref)
    se1, sd1, ae1, ad1 = err_stats(mel_p_ref)

    # Gate BCE-with-logits (numerically stable), summed over this block.
    x = gate_o_ref[...].astype(jnp.float32)          # (Bt, 1, T)
    z = gate_t_ref[...].astype(jnp.float32)
    bce = jnp.maximum(x, 0.0) - x * z + jnp.log(1.0 + jnp.exp(-jnp.abs(x)))
    gsum = jnp.sum(bce)

    # Pack everything into one lane-dense (C, 128) slab with broadcast selects
    # (cheap VPU work; keeps the output store unmasked / full-lane-width).
    lane = jax.lax.broadcasted_iota(jnp.int32, (C, 128), 1)
    packed = jnp.where(lane == 8, gsum, 0.0)
    for i, col in enumerate((se0, se1, sd0, sd1, ae0, ae1, ad0, ad1)):
        packed = jnp.where(lane == i, col, packed)
    out_ref[0] = packed


# ----------------------------------------------------------------------------
# Batch-tile picker: largest divisor of B (<= target) that fits the VMEM
# budget, preferring >= 2 grid steps so the parallel grid axis can use both
# TensorCores on v7x.
# ----------------------------------------------------------------------------
def _pick_batch_tile(B, C, T, itemsize, target=8, budget_bytes=36 << 20):
    def fits(d):
        # 2x double-buffered mel inputs + ~6 live f32 (Bt,C,T) intermediates
        return (2 * 3 * d * C * T * itemsize + 6 * d * C * T * 4) <= budget_bytes
    divisors = [d for d in range(1, B + 1)
                if B % d == 0 and d <= target and fits(d)]
    if not divisors:
        return 1
    multi = [d for d in divisors if B // d >= 2]
    return max(multi) if multi else max(divisors)


# ----------------------------------------------------------------------------
# Pallas wrapper
# ----------------------------------------------------------------------------
def _loss_sums(mel_out, mel_post, mel_tgt, gate_out, gate_tgt):
    B, C, T = mel_tgt.shape
    mel_itemsize = jnp.dtype(mel_tgt.dtype).itemsize
    gate_itemsize = jnp.dtype(gate_out.dtype).itemsize

    Bt = _pick_batch_tile(B, C, T, mel_itemsize)
    nblk = B // Bt

    # (B, T) -> (B, 1, T): metadata-only reshape, no cast, no extra HBM copy.
    gate_out3 = gate_out.reshape(B, 1, T)
    gate_tgt3 = gate_tgt.reshape(B, 1, T)

    use_roll = (T % 128 == 0) and (T > 1)

    n_mel = B * C * T
    cost = pl.CostEstimate(
        flops=26 * n_mel + 8 * B * T,
        transcendentals=2 * B * T,
        bytes_accessed=(3 * n_mel * mel_itemsize
                        + 2 * B * T * gate_itemsize
                        + nblk * C * 128 * 4),
    )

    block_in = 3 * Bt * C * T * mel_itemsize + 2 * Bt * T * gate_itemsize
    block_out = C * 128 * 4
    vmem_bytes = 2 * (block_in + block_out) + 6 * Bt * C * T * 4 + (2 << 20)
    vmem_limit = int(min(max(vmem_bytes, 4 << 20), 56 << 20))

    mel_spec = pl.BlockSpec((Bt, C, T), lambda b: (b, 0, 0))
    gate_spec = pl.BlockSpec((Bt, 1, T), lambda b: (b, 0, 0))

    return pl.pallas_call(
        functools.partial(_sums_kernel, use_roll),
        grid=(nblk,),
        in_specs=[mel_spec, mel_spec, mel_spec, gate_spec, gate_spec],
        out_specs=pl.BlockSpec((1, C, 128), lambda b: (b, 0, 0)),
        out_shape=jax.ShapeDtypeStruct((nblk, C, 128), jnp.float32),
        compiler_params=pltpu.CompilerParams(
            dimension_semantics=("parallel",),
            vmem_limit_bytes=vmem_limit,
        ),
        cost_estimate=cost,
    )(mel_out, mel_post, mel_tgt, gate_out3, gate_tgt3)


# ----------------------------------------------------------------------------
# Tacotron2Loss forward (matches the PyTorch module's semantics)
# ----------------------------------------------------------------------------
def tacotron2_loss(model_output, targets, mel_weight=1.0, gate_weight=0.005,
                   vel_weight=1.0, pos_weight=0.1, add_l1_loss=False):
    mel_out, mel_out_postnet, gate_out, _ = model_output
    mel_target, gate_target = targets[0], targets[1]
    B, C, T = mel_target.shape
    w_mel, w_gate, w_vel, w_pos = mel_weight, gate_weight, vel_weight, pos_weight

    sums = _loss_sums(mel_out, mel_out_postnet, mel_target,
                      gate_out, gate_target)

    per_channel = jnp.sum(sums[:, :, :8], axis=0)            # (C, 8)
    gate_loss = jnp.sum(sums[:, 0, 8]) / float(gate_out.size)

    def group_losses(ch_slice, n_ch):
        s = jnp.sum(per_channel[ch_slice], axis=0)           # (8,)
        n = float(B * n_ch * T)
        nd = float(B * n_ch * (T - 1))
        mse = (s[0] + s[1]) / n
        vel = (s[2] + s[3]) / nd
        l1 = (s[4] + s[5]) / n
        vel_l1 = (s[6] + s[7]) / nd
        return mse, vel, l1, vel_l1

    if C == 78:
        mel_loss, vel_mel, mel_l1, vel_mel_l1 = group_losses(slice(None, -3), C - 3)
        pos_loss, vel_pos, pos_l1, vel_pos_l1 = group_losses(slice(-3, None), 3)
        if add_l1_loss:
            return (w_gate * gate_loss
                    + w_mel * (mel_loss + mel_l1)
                    + w_vel * (vel_mel + vel_mel_l1)
                    + w_pos * (w_mel * (pos_loss + pos_l1)
                               + w_vel * (vel_pos + vel_pos_l1)))
        return (w_mel * mel_loss + w_gate * gate_loss + w_vel * vel_mel
                + w_pos * (w_mel * pos_loss + w_vel * vel_pos))
    else:
        mel_loss, vel_mel, mel_l1, vel_mel_l1 = group_losses(slice(None), C)
        if add_l1_loss:
            # Faithful to the PyTorch module: this branch omits the gate term.
            return w_mel * (mel_loss + mel_l1) + w_vel * (vel_mel + vel_mel_l1)
        return w_gate * gate_loss + w_mel * mel_loss + w_vel * vel_mel


# ----------------------------------------------------------------------------
# Pure-JAX reference (mirrors the PyTorch module) for sanity checking
# ----------------------------------------------------------------------------
def _reference_loss(model_output, targets, mel_weight=1.0, gate_weight=0.005,
                    vel_weight=1.0, pos_weight=0.1, add_l1_loss=False):
    mel_out, mel_post, gate_out, _ = model_output
    mel_tgt, gate_tgt = targets[0], targets[1]

    mse = lambda a, b: jnp.mean((a - b) ** 2)
    l1f = lambda a, b: jnp.mean(jnp.abs(a - b))
    d = lambda x: x[..., 1:] - x[..., :-1]

    x = gate_out.reshape(-1)
    z = gate_tgt.reshape(-1)
    gate_loss = jnp.mean(jnp.maximum(x, 0.0) - x * z
                         + jnp.log(1.0 + jnp.exp(-jnp.abs(x))))

    vt = d(mel_tgt)
    if mel_tgt.shape[1] == 78:
        mo_m, mp_m, mt_m, vt_m = (mel_out[:, :-3], mel_post[:, :-3],
                                  mel_tgt[:, :-3], vt[:, :-3])
        mo_p, mp_p, mt_p, vt_p = (mel_out[:, -3:], mel_post[:, -3:],
                                  mel_tgt[:, -3:], vt[:, -3:])
        mel_loss = mse(mo_m, mt_m) + mse(mp_m, mt_m)
        vel_mel = mse(d(mo_m), vt_m) + mse(d(mp_m), vt_m)
        pos_loss = mse(mo_p, mt_p) + mse(mp_p, mt_p)
        vel_pos = mse(d(mo_p), vt_p) + mse(d(mp_p), vt_p)
        if add_l1_loss:
            mel_l1 = l1f(mo_m, mt_m) + l1f(mp_m, mt_m)
            vel_mel_l1 = l1f(d(mo_m), vt_m) + l1f(d(mp_m), vt_m)
            pos_l1 = l1f(mo_p, mt_p) + l1f(mp_p, mt_p)
            vel_pos_l1 = l1f(d(mo_p), vt_p) + l1f(d(mp_p), vt_p)
            return (gate_weight * gate_loss
                    + mel_weight * (mel_loss + mel_l1)
                    + vel_weight * (vel_mel + vel_mel_l1)
                    + pos_weight * (mel_weight * (pos_loss + pos_l1)
                                    + vel_weight * (vel_pos + vel_pos_l1)))
        return (mel_weight * mel_loss + gate_weight * gate_loss
                + vel_weight * vel_mel
                + pos_weight * (mel_weight * pos_loss + vel_weight * vel_pos))
    else:
        mel_loss = mse(mel_out, mel_tgt) + mse(mel_post, mel_tgt)
        vel_mel = mse(d(mel_out), vt) + mse(d(mel_post), vt)
        if add_l1_loss:
            mel_l1 = l1f(mel_out, mel_tgt) + l1f(mel_post, mel_tgt)
            vel_mel_l1 = l1f(d(mel_out), vt) + l1f(d(mel_post), vt)
            return (mel_weight * (mel_loss + mel_l1)
                    + vel_weight * (vel_mel + vel_mel_l1))
        return (gate_weight * gate_loss + mel_weight * mel_loss
                + vel_weight * vel_mel)


# ----------------------------------------------------------------------------
if __name__ == "__main__":
    def make_inputs(key, B, C, T):
        k1, k2, k3, k4, k5 = jax.random.split(key, 5)
        mel_target = jax.random.normal(k1, (B, C, T), dtype=jnp.float32)
        mel_out = jax.random.normal(k2, (B, C, T), dtype=jnp.float32)
        mel_post = jax.random.normal(k3, (B, C, T), dtype=jnp.float32)
        gate_out = jax.random.normal(k4, (B, T), dtype=jnp.float32)
        gate_target = (jax.random.uniform(k5, (B, T)) > 0.5).astype(jnp.float32)
        return (mel_out, mel_post, gate_out, None), (mel_target, gate_target)

    key0, key1, key2 = jax.random.split(jax.random.PRNGKey(0), 3)

    # Case 1: general path (n_mel_channels != 78)
    mo1, tg1 = make_inputs(key0, B=2, C=4, T=16)
    loss1 = jax.block_until_ready(tacotron2_loss(mo1, tg1))
    ref1 = _reference_loss(mo1, tg1)
    assert jnp.isfinite(loss1)
    assert jnp.allclose(loss1, ref1, rtol=1e-4, atol=1e-4), (loss1, ref1)

    # Case 2: channel-split path (n_mel_channels == 78) with the L1 terms
    mo2, tg2 = make_inputs(key1, B=2, C=78, T=16)
    loss2 = jax.block_until_ready(tacotron2_loss(mo2, tg2, add_l1_loss=True))
    ref2 = _reference_loss(mo2, tg2, add_l1_loss=True)
    assert jnp.isfinite(loss2)
    assert jnp.allclose(loss2, ref2, rtol=1e-4, atol=1e-4), (loss2, ref2)

    # Case 3: batch-blocked grid (Bt=2, two grid steps) with odd C / odd T
    mo3, tg3 = make_inputs(key2, B=4, C=5, T=23)
    loss3 = jax.block_until_ready(tacotron2_loss(mo3, tg3))
    ref3 = _reference_loss(mo3, tg3)
    assert jnp.isfinite(loss3)
    assert jnp.allclose(loss3, ref3, rtol=1e-4, atol=1e-4), (loss3, ref3)

    print("KERNEL_OK")
</pallas_src>

<mosaic_0001>
module attributes {stable_mosaic.version = 11 : i64} {
  func.func @_sums_kernel(%arg0: i32, %arg1: memref<1x4x16xf32, #tpu.memory_space<vmem>>, %arg2: memref<1x4x16xf32, #tpu.memory_space<vmem>>, %arg3: memref<1x4x16xf32, #tpu.memory_space<vmem>>, %arg4: memref<1x1x16xf32, #tpu.memory_space<vmem>>, %arg5: memref<1x1x16xf32, #tpu.memory_space<vmem>>, %arg6: memref<1x4x128xf32, #tpu.memory_space<vmem>>) attributes {dimension_semantics = [#tpu.dimension_semantics<parallel>], iteration_bounds = array<i64: 2>, scalar_prefetch = 0 : i64, scratch_operands = 0 : i64, tpu.core_type = #tpu.core_type<tc>, window_params = [{transform_indices = @transform_0, window_bounds = array<i64: 1, 4, 16>}, {transform_indices = @transform_1, window_bounds = array<i64: 1, 4, 16>}, {transform_indices = @transform_2, window_bounds = array<i64: 1, 4, 16>}, {transform_indices = @transform_3, window_bounds = array<i64: 1, 1, 16>}, {transform_indices = @transform_4, window_bounds = array<i64: 1, 1, 16>}, {transform_indices = @transform_5, window_bounds = array<i64: 1, 4, 128>}]} {
    %c0 = arith.constant 0 : index
    %c0_0 = arith.constant 0 : index
    %c0_1 = arith.constant 0 : index
    %0 = vector.load %arg1[%c0, %c0_0, %c0_1] : memref<1x4x16xf32, #tpu.memory_space<vmem>>, vector<1x4x16xf32>
    %c0_2 = arith.constant 0 : index
    %c0_3 = arith.constant 0 : index
    %c0_4 = arith.constant 0 : index
    %1 = vector.load %arg3[%c0_2, %c0_3, %c0_4] : memref<1x4x16xf32, #tpu.memory_space<vmem>>, vector<1x4x16xf32>
    %2 = arith.subf %0, %1 : vector<1x4x16xf32>
    %3 = arith.mulf %2, %2 : vector<1x4x16xf32>
    %cst = arith.constant dense<0.000000e+00> : vector<1x4xf32>
    %4 = vector.multi_reduction <add>, %3, %cst [2] : vector<1x4x16xf32> to vector<1x4xf32>
    %5 = vector.shape_cast %4 : vector<1x4xf32> to vector<1x4x1xf32>
    %cst_5 = arith.constant dense<0.000000e+00> : vector<4x1xf32>
    %6 = vector.multi_reduction <add>, %5, %cst_5 [0] : vector<1x4x1xf32> to vector<4x1xf32>
    %7 = math.absf %2 : vector<1x4x16xf32>
    %cst_6 = arith.constant dense<0.000000e+00> : vector<1x4xf32>
    %8 = vector.multi_reduction <add>, %7, %cst_6 [2] : vector<1x4x16xf32> to vector<1x4xf32>
    %9 = vector.shape_cast %8 : vector<1x4xf32> to vector<1x4x1xf32>
    %cst_7 = arith.constant dense<0.000000e+00> : vector<4x1xf32>
    %10 = vector.multi_reduction <add>, %9, %cst_7 [0] : vector<1x4x1xf32> to vector<4x1xf32>
    %11 = vector.extract_strided_slice %2 {offsets = [0, 0, 1], sizes = [1, 4, 15], strides = [1, 1, 1]} : vector<1x4x16xf32> to vector<1x4x15xf32>
    %12 = vector.extract_strided_slice %2 {offsets = [0, 0, 0], sizes = [1, 4, 15], strides = [1, 1, 1]} : vector<1x4x16xf32> to vector<1x4x15xf32>
    %13 = arith.subf %11, %12 : vector<1x4x15xf32>
    %14 = arith.mulf %13, %13 : vector<1x4x15xf32>
    %cst_8 = arith.constant dense<0.000000e+00> : vector<1x4xf32>
    %15 = vector.multi_reduction <add>, %14, %cst_8 [2] : vector<1x4x15xf32> to vector<1x4xf32>
    %16 = vector.shape_cast %15 : vector<1x4xf32> to vector<1x4x1xf32>
    %cst_9 = arith.constant dense<0.000000e+00> : vector<4x1xf32>
    %17 = vector.multi_reduction <add>, %16, %cst_9 [0] : vector<1x4x1xf32> to vector<4x1xf32>
    %18 = math.absf %13 : vector<1x4x15xf32>
    %cst_10 = arith.constant dense<0.000000e+00> : vector<1x4xf32>
    %19 = vector.multi_reduction <add>, %18, %cst_10 [2] : vector<1x4x15xf32> to vector<1x4xf32>
    %20 = vector.shape_cast %19 : vector<1x4xf32> to vector<1x4x1xf32>
    %cst_11 = arith.constant dense<0.000000e+00> : vector<4x1xf32>
    %21 = vector.multi_reduction <add>, %20, %cst_11 [0] : vector<1x4x1xf32> to vector<4x1xf32>
    %c0_12 = arith.constant 0 : index
    %c0_13 = arith.constant 0 : index
    %c0_14 = arith.constant 0 : index
    %22 = vector.load %arg2[%c0_12, %c0_13, %c0_14] : memref<1x4x16xf32, #tpu.memory_space<vmem>>, vector<1x4x16xf32>
    %c0_15 = arith.constant 0 : index
    %c0_16 = arith.constant 0 : index
    %c0_17 = arith.constant 0 : index
    %23 = vector.load %arg3[%c0_15, %c0_16, %c0_17] : memref<1x4x16xf32, #tpu.memory_space<vmem>>, vector<1x4x16xf32>
    %24 = arith.subf %22, %23 : vector<1x4x16xf32>
    %25 = arith.mulf %24, %24 : vector<1x4x16xf32>
    %cst_18 = arith.constant dense<0.000000e+00> : vector<1x4xf32>
    %26 = vector.multi_reduction <add>, %25, %cst_18 [2] : vector<1x4x16xf32> to vector<1x4xf32>
    %27 = vector.shape_cast %26 : vector<1x4xf32> to vector<1x4x1xf32>
    %cst_19 = arith.constant dense<0.000000e+00> : vector<4x1xf32>
    %28 = vector.multi_reduction <add>, %27, %cst_19 [0] : vector<1x4x1xf32> to vector<4x1xf32>
    %29 = math.absf %24 : vector<1x4x16xf32>
    %cst_20 = arith.constant dense<0.000000e+00> : vector<1x4xf32>
    %30 = vector.multi_reduction <add>, %29, %cst_20 [2] : vector<1x4x16xf32> to vector<1x4xf32>
    %31 = vector.shape_cast %30 : vector<1x4xf32> to vector<1x4x1xf32>
    %cst_21 = arith.constant dense<0.000000e+00> : vector<4x1xf32>
    %32 = vector.multi_reduction <add>, %31, %cst_21 [0] : vector<1x4x1xf32> to vector<4x1xf32>
    %33 = vector.extract_strided_slice %24 {offsets = [0, 0, 1], sizes = [1, 4, 15], strides = [1, 1, 1]} : vector<1x4x16xf32> to vector<1x4x15xf32>
    %34 = vector.extract_strided_slice %24 {offsets = [0, 0, 0], sizes = [1, 4, 15], strides = [1, 1, 1]} : vector<1x4x16xf32> to vector<1x4x15xf32>
    %35 = arith.subf %33, %34 : vector<1x4x15xf32>
    %36 = arith.mulf %35, %35 : vector<1x4x15xf32>
    %cst_22 = arith.constant dense<0.000000e+00> : vector<1x4xf32>
    %37 = vector.multi_reduction <add>, %36, %cst_22 [2] : vector<1x4x15xf32> to vector<1x4xf32>
    %38 = vector.shape_cast %37 : vector<1x4xf32> to vector<1x4x1xf32>
    %cst_23 = arith.constant dense<0.000000e+00> : vector<4x1xf32>
    %39 = vector.multi_reduction <add>, %38, %cst_23 [0] : vector<1x4x1xf32> to vector<4x1xf32>
    %40 = math.absf %35 : vector<1x4x15xf32>
    %cst_24 = arith.constant dense<0.000000e+00> : vector<1x4xf32>
    %41 = vector.multi_reduction <add>, %40, %cst_24 [2] : vector<1x4x15xf32> to vector<1x4xf32>
    %42 = vector.shape_cast %41 : vector<1x4xf32> to vector<1x4x1xf32>
    %cst_25 = arith.constant dense<0.000000e+00> : vector<4x1xf32>
    %43 = vector.multi_reduction <add>, %42, %cst_25 [0] : vector<1x4x1xf32> to vector<4x1xf32>
    %c0_26 = arith.constant 0 : index
    %c0_27 = arith.constant 0 : index
    %c0_28 = arith.constant 0 : index
    %44 = vector.load %arg4[%c0_26, %c0_27, %c0_28] : memref<1x1x16xf32, #tpu.memory_space<vmem>>, vector<1x1x16xf32>
    %c0_29 = arith.constant 0 : index
    %c0_30 = arith.constant 0 : index
    %c0_31 = arith.constant 0 : index
    %45 = vector.load %arg5[%c0_29, %c0_30, %c0_31] : memref<1x1x16xf32, #tpu.memory_space<vmem>>, vector<1x1x16xf32>
    %cst_32 = arith.constant 0.000000e+00 : f32
    %46 = vector.broadcast %cst_32 : f32 to vector<1x1x16xf32>
    %47 = arith.maximumf %44, %46 : vector<1x1x16xf32>
    %48 = arith.mulf %44, %45 : vector<1x1x16xf32>
    %49 = arith.subf %47, %48 : vector<1x1x16xf32>
    %50 = math.absf %44 : vector<1x1x16xf32>
    %cst_33 = arith.constant 0.000000e+00 : f32
    %51 = vector.broadcast %cst_33 : f32 to vector<1x1x16xf32>
    %52 = arith.subf %51, %50 : vector<1x1x16xf32>
    %53 = math.exp %52 : vector<1x1x16xf32>
    %cst_34 = arith.constant 1.000000e+00 : f32
    %54 = vector.broadcast %cst_34 : f32 to vector<1x1x16xf32>
    %55 = arith.addf %54, %53 : vector<1x1x16xf32>
    %56 = math.log %55 : vector<1x1x16xf32>
    %57 = arith.addf %49, %56 : vector<1x1x16xf32>
    %58 = vector.shape_cast %57 : vector<1x1x16xf32> to vector<1x1x1x16xf32>
    %cst_35 = arith.constant dense<0.000000e+00> : vector<1xf32>
    %59 = vector.multi_reduction <add>, %58, %cst_35 [1, 2, 3] : vector<1x1x1x16xf32> to vector<1xf32>
    %60 = vector.shape_cast %59 : vector<1xf32> to vector<1x1x1x1xf32>
    %61 = vector.extract %60[0, 0, 0, 0] : f32 from vector<1x1x1x1xf32>
    %62 = tpu.iota {dimensions = array<i32: 1>} : vector<4x128xi32>
    %c8_i32 = arith.constant 8 : i32
    %63 = vector.broadcast %c8_i32 : i32 to vector<4x128xi32>
    %64 = arith.cmpi eq, %62, %63 : vector<4x128xi32>
    %cst_36 = arith.constant 0.000000e+00 : f32
    %65 = vector.broadcast %61 : f32 to vector<4x128xf32>
    %66 = vector.broadcast %cst_36 : f32 to vector<4x128xf32>
    %67 = arith.select %64, %65, %66 : vector<4x128xi1>, vector<4x128xf32>
    %c0_i32 = arith.constant 0 : i32
    %68 = vector.broadcast %c0_i32 : i32 to vector<4x128xi32>
    %69 = arith.cmpi eq, %62, %68 : vector<4x128xi32>
    %70 = vector.shape_cast %6 : vector<4x1xf32> to vector<4x1xf32>
    %71 = vector.broadcast %70 : vector<4x1xf32> to vector<4x128xf32>
    %72 = arith.select %69, %71, %67 : vector<4x128xi1>, vector<4x128xf32>
    %c1_i32 = arith.constant 1 : i32
    %73 = vector.broadcast %c1_i32 : i32 to vector<4x128xi32>
    %74 = arith.cmpi eq, %62, %73 : vector<4x128xi32>
    %75 = vector.shape_cast %28 : vector<4x1xf32> to vector<4x1xf32>
    %76 = vector.broadcast %75 : vector<4x1xf32> to vector<4x128xf32>
    %77 = arith.select %74, %76, %72 : vector<4x128xi1>, vector<4x128xf32>
    %c2_i32 = arith.constant 2 : i32
    %78 = vector.broadcast %c2_i32 : i32 to vector<4x128xi32>
    %79 = arith.cmpi eq, %62, %78 : vector<4x128xi32>
    %80 = vector.shape_cast %17 : vector<4x1xf32> to vector<4x1xf32>
    %81 = vector.broadcast %80 : vector<4x1xf32> to vector<4x128xf32>
    %82 = arith.select %79, %81, %77 : vector<4x128xi1>, vector<4x128xf32>
    %c3_i32 = arith.constant 3 : i32
    %83 = vector.broadcast %c3_i32 : i32 to vector<4x128xi32>
    %84 = arith.cmpi eq, %62, %83 : vector<4x128xi32>
    %85 = vector.shape_cast %39 : vector<4x1xf32> to vector<4x1xf32>
    %86 = vector.broadcast %85 : vector<4x1xf32> to vector<4x128xf32>
    %87 = arith.select %84, %86, %82 : vector<4x128xi1>, vector<4x128xf32>
    %c4_i32 = arith.constant 4 : i32
    %88 = vector.broadcast %c4_i32 : i32 to vector<4x128xi32>
    %89 = arith.cmpi eq, %62, %88 : vector<4x128xi32>
    %90 = vector.shape_cast %10 : vector<4x1xf32> to vector<4x1xf32>
    %91 = vector.broadcast %90 : vector<4x1xf32> to vector<4x128xf32>
    %92 = arith.select %89, %91, %87 : vector<4x128xi1>, vector<4x128xf32>
    %c5_i32 = arith.constant 5 : i32
    %93 = vector.broadcast %c5_i32 : i32 to vector<4x128xi32>
    %94 = arith.cmpi eq, %62, %93 : vector<4x128xi32>
    %95 = vector.shape_cast %32 : vector<4x1xf32> to vector<4x1xf32>
    %96 = vector.broadcast %95 : vector<4x1xf32> to vector<4x128xf32>
    %97 = arith.select %94, %96, %92 : vector<4x128xi1>, vector<4x128xf32>
    %c6_i32 = arith.constant 6 : i32
    %98 = vector.broadcast %c6_i32 : i32 to vector<4x128xi32>
    %99 = arith.cmpi eq, %62, %98 : vector<4x128xi32>
    %100 = vector.shape_cast %21 : vector<4x1xf32> to vector<4x1xf32>
    %101 = vector.broadcast %100 : vector<4x1xf32> to vector<4x128xf32>
    %102 = arith.select %99, %101, %97 : vector<4x128xi1>, vector<4x128xf32>
    %c7_i32 = arith.constant 7 : i32
    %103 = vector.broadcast %c7_i32 : i32 to vector<4x128xi32>
    %104 = arith.cmpi eq, %62, %103 : vector<4x128xi32>
    %105 = vector.shape_cast %43 : vector<4x1xf32> to vector<4x1xf32>
    %106 = vector.broadcast %105 : vector<4x1xf32> to vector<4x128xf32>
    %107 = arith.select %104, %106, %102 : vector<4x128xi1>, vector<4x128xf32>
    %c0_37 = arith.constant 0 : index
    %c0_38 = arith.constant 0 : index
    %c0_39 = arith.constant 0 : index
    %108 = vector.load %arg6[%c0_37, %c0_38, %c0_39] : memref<1x4x128xf32, #tpu.memory_space<vmem>>, vector<1x4x128xf32>
    %109 = vector.shape_cast %108 : vector<1x4x128xf32> to vector<4x128xf32>
    %110 = vector.shape_cast %107 : vector<4x128xf32> to vector<1x4x128xf32>
    tpu.vector_store %arg6[%c0_37, %c0_38, %c0_39], %110 {strides = array<i32>} : memref<1x4x128xf32, #tpu.memory_space<vmem>>, vector<1x4x128xf32>,
    return
  }
  func.func @transform_0(%arg0: i32) -> (i32, i32, i32) {
    %c0_i32 = arith.constant 0 : i32
    %c0_i32_0 = arith.constant 0 : i32
    %c0_i32_1 = arith.constant 0 : i32
    return %arg0, %c0_i32, %c0_i32_0 : i32, i32, i32
  }
  func.func @transform_1(%arg0: i32) -> (i32, i32, i32) {
    %c0_i32 = arith.constant 0 : i32
    %c0_i32_0 = arith.constant 0 : i32
    %c0_i32_1 = arith.constant 0 : i32
    return %arg0, %c0_i32, %c0_i32_0 : i32, i32, i32
  }
  func.func @transform_2(%arg0: i32) -> (i32, i32, i32) {
    %c0_i32 = arith.constant 0 : i32
    %c0_i32_0 = arith.constant 0 : i32
    %c0_i32_1 = arith.constant 0 : i32
    return %arg0, %c0_i32, %c0_i32_0 : i32, i32, i32
  }
  func.func @transform_3(%arg0: i32) -> (i32, i32, i32) {
    %c0_i32 = arith.constant 0 : i32
    %c0_i32_0 = arith.constant 0 : i32
    %c0_i32_1 = arith.constant 0 : i32
    return %arg0, %c0_i32, %c0_i32_0 : i32, i32, i32
  }
  func.func @transform_4(%arg0: i32) -> (i32, i32, i32) {
    %c0_i32 = arith.constant 0 : i32
    %c0_i32_0 = arith.constant 0 : i32
    %c0_i32_1 = arith.constant 0 : i32
    return %arg0, %c0_i32, %c0_i32_0 : i32, i32, i32
  }
  func.func @transform_5(%arg0: i32) -> (i32, i32, i32) {
    %c0_i32 = arith.constant 0 : i32
    %c0_i32_0 = arith.constant 0 : i32
    %c0_i32_1 = arith.constant 0 : i32
    return %arg0, %c0_i32, %c0_i32_0 : i32, i32, i32
  }
}

</mosaic_0001>

<llo_original>
// kernel: tpu_custom_call.1
$region0: #{tpu_custom_call.1}
  #allocation0 [shape = 'u32[]', space=smem, size = 0x4, offset = 0x4, fixed_abs, tag = 'smem constant byte address 0x4 - core index']
  #allocation1 [shape = 'u32[144,128]{1,0:T(1,128)}', space=vmem, size = 0x12000, scoped, tag = 'internal scratch']
  %s0 = inlined_call_operand.hbm [shape: f32[2,4,16], index: 0, kind: input, shape index: {}]
  %s1 = inlined_call_operand.hbm [shape: f32[2,4,16], index: 1, kind: input, shape index: {}]
  %s2 = inlined_call_operand.hbm [shape: f32[2,4,16], index: 2, kind: input, shape index: {}]
  %s3 = inlined_call_operand.vmem [shape: f32[2,1,16], index: 3, kind: input, shape index: {}]
  %s4 = inlined_call_operand.vmem [shape: f32[2,1,16], index: 4, kind: input, shape index: {}]
  %s5 = inlined_call_operand.hbm [shape: f32[2,4,128], index: 5, kind: output, shape index: {}]
  %s6 = sld [smem:[#allocation0]]
  $region65: #{tpu_custom_call.1} parent=0
    _
  %s8 = ssub.s32 1, %s6
  %s9 = scalar_select 0, %s8, %s6
  $region1: #{tpu_custom_call.1} parent=0
    #allocation2 [shape = 'u8[4096]{0}', space=vmem, size = 0x1000, scoped, tag = 'input window, operand 0']
    #allocation3 [shape = 's32[2]{0}', space=sflag, size = 0x8, scoped, tag = 'scoped memory for tpu_custom_call.1']
    #allocation4 [shape = 's32[2]{0}', space=sflag, size = 0x8, scoped, tag = 'scoped memory for tpu_custom_call.1']
    #allocation5 [shape = 'u8[4096]{0}', space=vmem, size = 0x1000, scoped, tag = 'input window, operand 1']
    #allocation6 [shape = 's32[2]{0}', space=sflag, size = 0x8, scoped, tag = 'scoped memory for tpu_custom_call.1']
    #allocation7 [shape = 'u8[4096]{0}', space=vmem, size = 0x1000, scoped, tag = 'input window, operand 2']
    #allocation8 [shape = 'u8[4096]{0}', space=vmem, size = 0x1000, scoped, tag = 'output window, operand 0']
    %10 = vsyncpa [#allocation3], 0
    %s11 = scalar_lea.sflag [#allocation3], 1
    %12 = vsyncpa %s11, 0
    %13 = vsyncpa [#allocation6], 0
    %s14 = scalar_lea.sflag [#allocation6], 1
    %15 = vsyncpa %s14, 0
    %16 = vsyncpa [#allocation4], 0
    %s17 = scalar_lea.sflag [#allocation4], 1
    %18 = vsyncpa %s17, 0
    loop: start=0, step=1, limit=4
    $region2: #{tpu_custom_call.1} parent=1 // loop_pre_header
      _
    $region3: #{tpu_custom_call.1} parent=1 // loop_header
      %s20 = sphi 0, %s24
      %p21 = scmp.ge.s32.totalorder %s20, 4
      %s30 = sphi 0, %s32
      %s33 = sphi 0, %s30
      %s34 = sphi 0, %s33
      %s50 = sphi 0, %s34
      %s56 = sphi 0, %s58
      %s59 = sphi 0, %s56
      %s60 = sphi 0, %s59
      %s76 = sphi 0, %s60
      %s82 = sphi 0, %s84
      %s85 = sphi 0, %s82
      %s86 = sphi 0, %s85
      %s102 = sphi 0, %s86
      %s108 = sphi 0, %s110
      %s111 = sphi 0, %s108
      %s112 = sphi 0, %s111
      %s128 = sphi 0, %s112
      %s134 = sphi 0, %s136
      %s137 = sphi 0, %s134
      %s138 = sphi 0, %s137
      %s154 = sphi 0, %s138
      %s160 = sphi 0, %s162
      %s163 = sphi 0, %s160
      %s164 = sphi 0, %s163
      %s180 = sphi 0, %s164
    $region4: #{tpu_custom_call.1} parent=1 // loop_header_branch
      %23 = sbr.rel (%p21) target = $region8
    $region5: #{tpu_custom_call.1} parent=1 // loop_body
      %s25 = ssub.s32 %s20, 1
      %s26 = ssub.s32 %s20, 2
      %s27 = sadd.s32 %s20, 1
      %s28 = ssub.s32 %s20, %s27
      %p29 = scmp.eq.s32.totalorder %s28, 0
      %s31 = sadd.s32 %s30, 1
      %s32 = scalar_select %p29, %s30, %s31
      %p35 = pneg %p29
      %p36 = scmp.eq.s32.totalorder %s20, 1
      %p37 = por %p35, %p36
      %p38 = scmp.ne.s32.totalorder %s30, %s33
      %p39 = scmp.eq.s32.totalorder %s20, 0
      %p40 = por %p38, %p39
      %p41 = scmp.ne.s32.totalorder %s30, %s33
      %p42 = scmp.eq.s32.totalorder %s25, 1
      %p43 = por %p41, %p42
      %p44 = scmp.ne.s32.totalorder %s33, %s34
      %p45 = scmp.eq.s32.totalorder %s25, 0
      %p46 = por %p44, %p45
      %p47 = scmp.ne.s32.totalorder %s33, %s34
      %p48 = scmp.eq.s32.totalorder %s26, 1
      %p49 = por %p47, %p48
      %p51 = scmp.ne.s32.totalorder %s34, %s50
      %p52 = scmp.eq.s32.totalorder %s26, 0
      %p53 = por %p51, %p52
      %s54 = ssub.s32 %s20, %s27
      %p55 = scmp.eq.s32.totalorder %s54, 0
      %s57 = sadd.s32 %s56, 1
      %s58 = scalar_select %p55, %s56, %s57
      %p61 = pneg %p55
      %p62 = scmp.eq.s32.totalorder %s20, 1
      %p63 = por %p61, %p62
      %p64 = scmp.ne.s32.totalorder %s56, %s59
      %p65 = scmp.eq.s32.totalorder %s20, 0
      %p66 = por %p64, %p65
      %p67 = scmp.ne.s32.totalorder %s56, %s59
      %p68 = scmp.eq.s32.totalorder %s25, 1
      %p69 = por %p67, %p68
      %p70 = scmp.ne.s32.totalorder %s59, %s60
      %p71 = scmp.eq.s32.totalorder %s25, 0
      %p72 = por %p70, %p71
      %p73 = scmp.ne.s32.totalorder %s59, %s60
      %p74 = scmp.eq.s32.totalorder %s26, 1
      %p75 = por %p73, %p74
      %p77 = scmp.ne.s32.totalorder %s60, %s76
      %p78 = scmp.eq.s32.totalorder %s26, 0
      %p79 = por %p77, %p78
      %s80 = ssub.s32 %s20, %s27
      %p81 = scmp.eq.s32.totalorder %s80, 0
      %s83 = sadd.s32 %s82, 1
      %s84 = scalar_select %p81, %s82, %s83
      %p87 = pneg %p81
      %p88 = scmp.eq.s32.totalorder %s20, 1
      %p89 = por %p87, %p88
      %p90 = scmp.ne.s32.totalorder %s82, %s85
      %p91 = scmp.eq.s32.totalorder %s20, 0
      %p92 = por %p90, %p91
      %p93 = scmp.ne.s32.totalorder %s82, %s85
      %p94 = scmp.eq.s32.totalorder %s25, 1
      %p95 = por %p93, %p94
      %p96 = scmp.ne.s32.totalorder %s85, %s86
      %p97 = scmp.eq.s32.totalorder %s25, 0
      %p98 = por %p96, %p97
      %p99 = scmp.ne.s32.totalorder %s85, %s86
      %p100 = scmp.eq.s32.totalorder %s26, 1
      %p101 = por %p99, %p100
      %p103 = scmp.ne.s32.totalorder %s86, %s102
      %p104 = scmp.eq.s32.totalorder %s26, 0
      %p105 = por %p103, %p104
      %s106 = ssub.s32 %s20, %s27
      %p107 = scmp.eq.s32.totalorder %s106, 0
      %s109 = sadd.s32 %s108, 1
      %s110 = scalar_select %p107, %s108, %s109
      %p113 = pneg %p107
      %p114 = scmp.eq.s32.totalorder %s20, 1
      %p115 = por %p113, %p114
      %p116 = scmp.ne.s32.totalorder %s108, %s111
      %p117 = scmp.eq.s32.totalorder %s20, 0
      %p118 = por %p116, %p117
      %p119 = scmp.ne.s32.totalorder %s108, %s111
      %p120 = scmp.eq.s32.totalorder %s25, 1
      %p121 = por %p119, %p120
      %p122 = scmp.ne.s32.totalorder %s111, %s112
      %p123 = scmp.eq.s32.totalorder %s25, 0
      %p124 = por %p122, %p123
      %p125 = scmp.ne.s32.totalorder %s111, %s112
      %p126 = scmp.eq.s32.totalorder %s26, 1
      %p127 = por %p125, %p126
      %p129 = scmp.ne.s32.totalorder %s112, %s128
      %p130 = scmp.eq.s32.totalorder %s26, 0
      %p131 = por %p129, %p130
      %s132 = ssub.s32 %s20, %s27
      %p133 = scmp.eq.s32.totalorder %s132, 0
      %s135 = sadd.s32 %s134, 1
      %s136 = scalar_select %p133, %s134, %s135
      %p139 = pneg %p133
      %p140 = scmp.eq.s32.totalorder %s20, 1
      %p141 = por %p139, %p140
      %p142 = scmp.ne.s32.totalorder %s134, %s137
      %p143 = scmp.eq.s32.totalorder %s20, 0
      %p144 = por %p142, %p143
      %p145 = scmp.ne.s32.totalorder %s134, %s137
      %p146 = scmp.eq.s32.totalorder %s25, 1
      %p147 = por %p145, %p146
      %p148 = scmp.ne.s32.totalorder %s137, %s138
      %p149 = scmp.eq.s32.totalorder %s25, 0
      %p150 = por %p148, %p149
      %p151 = scmp.ne.s32.totalorder %s137, %s138
      %p152 = scmp.eq.s32.totalorder %s26, 1
      %p153 = por %p151, %p152
      %p155 = scmp.ne.s32.totalorder %s138, %s154
      %p156 = scmp.eq.s32.totalorder %s26, 0
      %p157 = por %p155, %p156
      %s158 = ssub.s32 %s20, %s27
      %p159 = scmp.eq.s32.totalorder %s158, 0
      %s161 = sadd.s32 %s160, 1
      %s162 = scalar_select %p159, %s160, %s161
      %p165 = pneg %p159
      %p166 = scmp.eq.s32.totalorder %s20, 1
      %p167 = por %p165, %p166
      %p168 = scmp.ne.s32.totalorder %s160, %s163
      %p169 = scmp.eq.s32.totalorder %s20, 0
      %p170 = por %p168, %p169
      %p171 = scmp.ne.s32.totalorder %s160, %s163
      %p172 = scmp.eq.s32.totalorder %s25, 1
      %p173 = por %p171, %p172
      %p174 = scmp.ne.s32.totalorder %s163, %s164
      %p175 = scmp.eq.s32.totalorder %s25, 0
      %p176 = por %p174, %p175
      %p177 = scmp.ne.s32.totalorder %s163, %s164
      %p178 = scmp.eq.s32.totalorder %s26, 1
      %p179 = por %p177, %p178
      %p181 = scmp.ne.s32.totalorder %s164, %s180
      %p182 = scmp.eq.s32.totalorder %s26, 0
      %p183 = por %p181, %p182
      %p184 = scmp.le.s32.totalorder 1, %s20
      %p185 = scmp.lt.s32.totalorder %s20, 3
      %p186 = pnand %p184, %p185
      %p187 = pneg %p186
      // Predicated region
      $region9: #{tpu_custom_call.1} parent=5 // pred_check
        _
      $region10: #{tpu_custom_call.1} parent=5 // pred_check_branch
        %189 = sbr.rel (%p186) target = $region12
      $region11: #{tpu_custom_call.1} parent=5 // pred_region
        %s190 = ssub.s32 %s20, 1
      $region12: #{tpu_custom_call.1} parent=5 // pred_fallthru
        _
      %p191 = scmp.lt.s32.totalorder %s20, 2
      // Predicated region
      $region13: #{tpu_custom_call.1} parent=5 // pred_check
        %p192 = pneg %p191
      $region14: #{tpu_custom_call.1} parent=5 // pred_check_branch
        %194 = sbr.rel (%p192) target = $region16
      $region15: #{tpu_custom_call.1} parent=5 // pred_region
        // Predicated region
        $region17: #{tpu_custom_call.1} parent=15 // pred_check
          %p195 = pneg %p40
        $region18: #{tpu_custom_call.1} parent=15 // pred_check_branch
          %197 = sbr.rel (%p195) target = $region20
        $region19: #{tpu_custom_call.1} parent=15 // pred_region
          %s198 = sand.u32 %s30, 1
          %s199 = scalar_lea.sflag [#allocation3], %s198
          %s200 = sand.u32 %s30, 1
          %s201 = smul.addr %s200, 4
          %s202 = scalar_lea.vmem [#allocation2], %s201
          %s204 = ssub.s32 64, 64
          %205 = vsyncadd %s199, %s204
          %s206 = smul.addr %s20, 64
          %s207 = scalar_lea.hbm %s0, %s206
          %s209 = sshll.u32 %s202, 4
          %s210 = int_to_ptr.vmem [resolvable:$true] %s209
          %212 = dma.hbm_to_vmem [thread:$0]  %s207, 64, %s210, %s199
        $region20: #{tpu_custom_call.1} parent=15 // pred_fallthru
          _
        // Predicated region
        $region21: #{tpu_custom_call.1} parent=15 // pred_check
          %p213 = pneg %p66
        $region22: #{tpu_custom_call.1} parent=15 // pred_check_branch
          %215 = sbr.rel (%p213) target = $region24
        $region23: #{tpu_custom_call.1} parent=15 // pred_region
          %s216 = sand.u32 %s20, 1
          %s217 = scalar_lea.sflag [#allocation6], %s216
          %s218 = sand.u32 %s56, 1
          %s219 = smul.addr %s218, 4
          %s220 = scalar_lea.vmem [#allocation5], %s219
          %s222 = ssub.s32 64, 64
          %223 = vsyncadd %s217, %s222
          %s224 = smul.addr %s20, 64
          %s225 = scalar_lea.hbm %s1, %s224
          %s227 = sshll.u32 %s220, 4
          %s228 = int_to_ptr.vmem [resolvable:$true] %s227
          %230 = dma.hbm_to_vmem [thread:$0]  %s225, 64, %s228, %s217
        $region24: #{tpu_custom_call.1} parent=15 // pred_fallthru
          _
        // Predicated region
        $region25: #{tpu_custom_call.1} parent=15 // pred_check
          %p231 = pneg %p92
        $region26: #{tpu_custom_call.1} parent=15 // pred_check_branch
          %233 = sbr.rel (%p231) target = $region28
        $region27: #{tpu_custom_call.1} parent=15 // pred_region
          %s234 = sand.u32 %s20, 1
          %s235 = scalar_lea.sflag [#allocation6], %s234
          %s236 = sand.u32 %s82, 1
          %s237 = smul.addr %s236, 4
          %s238 = scalar_lea.vmem [#allocation7], %s237
          %s240 = ssub.s32 64, 64
          %241 = vsyncadd %s235, %s240
          %s242 = smul.addr %s20, 64
          %s243 = scalar_lea.hbm %s2, %s242
          %s245 = sshll.u32 %s238, 4
          %s246 = int_to_ptr.vmem [resolvable:$true] %s245
          %248 = dma.hbm_to_vmem [thread:$0]  %s243, 64, %s246, %s235
        $region28: #{tpu_custom_call.1} parent=15 // pred_fallthru
          _
        // Predicated region
        $region29: #{tpu_custom_call.1} parent=15 // pred_check
          %p249 = pneg %p118
        $region30: #{tpu_custom_call.1} parent=15 // pred_check_branch
          %251 = sbr.rel (%p249) target = $region32
        $region31: #{tpu_custom_call.1} parent=15 // pred_region
          %p252 = scmp.lt.s32.totalorder %s20, 1
          %s253 = scalar_select %p252, %s20, 1
          %s254 = scalar_lea.vmem %s3, %s253
        $region32: #{tpu_custom_call.1} parent=15 // pred_fallthru
          _
        // Predicated region
        $region33: #{tpu_custom_call.1} parent=15 // pred_check
          %p255 = pneg %p144
        $region34: #{tpu_custom_call.1} parent=15 // pred_check_branch
          %257 = sbr.rel (%p255) target = $region36
        $region35: #{tpu_custom_call.1} parent=15 // pred_region
          %p258 = scmp.lt.s32.totalorder %s20, 1
          %s259 = scalar_select %p258, %s20, 1
          %s260 = scalar_lea.vmem %s4, %s259
        $region36: #{tpu_custom_call.1} parent=15 // pred_fallthru
          _
      $region16: #{tpu_custom_call.1} parent=5 // pred_fallthru
        _
      %p261 = scmp.le.s32.totalorder 1, %s20
      %p262 = scmp.lt.s32.totalorder %s20, 3
      %p263 = pnand %p261, %p262
      %p264 = pneg %p263
      // Predicated region
      $region37: #{tpu_custom_call.1} parent=5 // pred_check
        _
      $region38: #{tpu_custom_call.1} parent=5 // pred_check_branch
        %266 = sbr.rel (%p263) target = $region40
      $region39: #{tpu_custom_call.1} parent=5 // pred_region
        %s267 = ssub.s32 %s20, 1
        %s268 = sand.u32 %s33, 1
        %s269 = scalar_lea.sflag [#allocation3], %s268
        %s270 = sand.u32 %s33, 1
        %s271 = smul.addr %s270, 4
        %s272 = scalar_lea.vmem [#allocation2], %s271
        // Predicated region
        $region41: #{tpu_custom_call.1} parent=39 // pred_check
          %p273 = pneg %p46
        $region42: #{tpu_custom_call.1} parent=39 // pred_check_branch
          %275 = sbr.rel (%p273) target = $region44
        $region43: #{tpu_custom_call.1} parent=39 // pred_region
          %276 = dma.done %s269, 64
        $region44: #{tpu_custom_call.1} parent=39 // pred_fallthru
          _
        %s277 = sand.u32 %s25, 1
        %s278 = scalar_lea.sflag [#allocation6], %s277
        %s279 = sand.u32 %s59, 1
        %s280 = smul.addr %s279, 4
        %s281 = scalar_lea.vmem [#allocation5], %s280
        // Predicated region
        $region45: #{tpu_custom_call.1} parent=39 // pred_check
          %p282 = pneg %p72
        $region46: #{tpu_custom_call.1} parent=39 // pred_check_branch
          %284 = sbr.rel (%p282) target = $region48
        $region47: #{tpu_custom_call.1} parent=39 // pred_region
          %285 = dma.done %s278, 64
        $region48: #{tpu_custom_call.1} parent=39 // pred_fallthru
          _
        %s286 = sand.u32 %s25, 1
        %s287 = scalar_lea.sflag [#allocation6], %s286
        %s288 = sand.u32 %s85, 1
        %s289 = smul.addr %s288, 4
        %s290 = scalar_lea.vmem [#allocation7], %s289
        // Predicated region
        $region49: #{tpu_custom_call.1} parent=39 // pred_check
          %p291 = pneg %p98
        $region50: #{tpu_custom_call.1} parent=39 // pred_check_branch
          %293 = sbr.rel (%p291) target = $region52
        $region51: #{tpu_custom_call.1} parent=39 // pred_region
          %294 = dma.done %s287, 64
        $region52: #{tpu_custom_call.1} parent=39 // pred_fallthru
          _
        %s295 = sand.u32 %s33, 1
        %s296 = scalar_lea.sflag [#allocation3], %s295
        %s297 = sand.u32 %s33, 1
        %s298 = smul.addr %s297, 4
        %s299 = scalar_lea.vmem [#allocation2], %s298
        %p300 = pneg %p46
        %p301 = pneg %p43
        %s302 = sand.u32 %s25, 1
        %s303 = scalar_lea.sflag [#allocation6], %s302
        %s304 = sand.u32 %s59, 1
        %s305 = smul.addr %s304, 4
        %s306 = scalar_lea.vmem [#allocation5], %s305
        %p307 = pneg %p72
        %p308 = pneg %p69
        %s309 = sand.u32 %s25, 1
        %s310 = scalar_lea.sflag [#allocation6], %s309
        %s311 = sand.u32 %s85, 1
        %s312 = smul.addr %s311, 4
        %s313 = scalar_lea.vmem [#allocation7], %s312
        %p314 = pneg %p98
        %p315 = pneg %p95
        %p316 = scmp.lt.s32.totalorder %s25, 1
        %s317 = scalar_select %p316, %s25, 1
        %s318 = scalar_lea.vmem %s3, %s317
        %p319 = pneg %p124
        %p320 = pneg %p121
        %p321 = scmp.lt.s32.totalorder %s25, 1
        %s322 = scalar_select %p321, %s25, 1
        %s323 = scalar_lea.vmem %s4, %s322
        %p324 = pneg %p150
        %p325 = pneg %p147
        %p326 = pneg %p176
        %p327 = pneg %p173
        %s328 = sand.u32 %s163, 1
        %s329 = scalar_lea.sflag [#allocation4], %s328
        %s330 = sand.u32 %s163, 1
        %s331 = smul.addr %s330, 4
        %s332 = scalar_lea.vmem [#allocation8], %s331
        %p333 = scmp.lt.s32.totalorder %s25, 1
        %s334 = scalar_select %p333, %s25, 1
        %s335 = scalar_lea.vmem %s3, %s334
        %p336 = scmp.lt.s32.totalorder %s25, 1
        %s337 = scalar_select %p336, %s25, 1
        %s338 = scalar_lea.vmem %s4, %s337
        %v339 = vld [vmem:[%s272] sm:$0xf]
        %v340 = vld [vmem:[%s290] sm:$0xf]
        %v341 = vsub.f32 %v339, %v340
        %v342 = vmul.f32 %v341, %v341
        %vm343 = vcmask 125952
        %v344 = vsel %vm343, %v342, 0.0
        %345 = vadd.xlane.f32.xlu0 %v344
        %v346 = vpop.xlane.xlu0 %345
        %v347 = vadd.f32 %v346, 0.0
        %v348 = vand.u32 2147483647, %v341
        %v349 = vsel %vm343, %v348, 0.0
        %350 = vadd.xlane.f32.xlu0 %v349
        %v351 = vpop.xlane.xlu0 %350
        %v352 = vadd.f32 %v351, 0.0
        %354 = vrot.lane.b32.xlu0 %v341, 1
        %v355 = vpop.permute.xlu0 %354
        %v357 = vsub.f32 %v341, %v355
        %v358 = vmul.f32 %v357, %v357
        %360 = vrot.lane.b32.xlu0 %v358, 127
        %v361 = vpop.permute.xlu0 %360
        %vm363 = vcmask 117760
        %v364 = vsel %vm363, %v361, 0.0
        %365 = vadd.xlane.f32.xlu0 %v364
        %v366 = vpop.xlane.xlu0 %365
        %v367 = vadd.f32 %v366, 0.0
        %v368 = vand.u32 2147483647, %v357
        %370 = vrot.lane.b32.xlu0 %v368, 127
        %v371 = vpop.permute.xlu0 %370
        %v373 = vsel %vm363, %v371, 0.0
        %374 = vadd.xlane.f32.xlu0 %v373
        %v375 = vpop.xlane.xlu0 %374
        %v376 = vadd.f32 %v375, 0.0
        %v377 = vld [vmem:[%s281] sm:$0xf]
        %v378 = vsub.f32 %v377, %v340
        %v379 = vmul.f32 %v378, %v378
        %v380 = vsel %vm343, %v379, 0.0
        %381 = vadd.xlane.f32.xlu0 %v380
        %v382 = vpop.xlane.xlu0 %381
        %v383 = vadd.f32 %v382, 0.0
        %v384 = vand.u32 2147483647, %v378
        %v385 = vsel %vm343, %v384, 0.0
        %386 = vadd.xlane.f32.xlu0 %v385
        %v387 = vpop.xlane.xlu0 %386
        %v388 = vadd.f32 %v387, 0.0
        %390 = vrot.lane.b32.xlu0 %v378, 1
        %v391 = vpop.permute.xlu0 %390
        %v393 = vsub.f32 %v378, %v391
        %v394 = vmul.f32 %v393, %v393
        %396 = vrot.lane.b32.xlu0 %v394, 127
        %v397 = vpop.permute.xlu0 %396
        %v399 = vsel %vm363, %v397, 0.0
        %400 = vadd.xlane.f32.xlu0 %v399
        %v401 = vpop.xlane.xlu0 %400
        %v402 = vadd.f32 %v401, 0.0
        %v403 = vand.u32 2147483647, %v393
        %405 = vrot.lane.b32.xlu0 %v403, 127
        %v406 = vpop.permute.xlu0 %405
        %v408 = vsel %vm363, %v406, 0.0
        %409 = vadd.xlane.f32.xlu0 %v408
        %v410 = vpop.xlane.xlu0 %409
        %v411 = vadd.f32 %v410, 0.0
        %v412 = vld [vmem:[%s335] sm:$0x1]
        %v413 = vld [vmem:[%s338] sm:$0x1]
        %v414 = vmax.f32 %v412, 0.0
        %v415 = vmul.f32 %v412, %v413
        %v416 = vsub.f32 %v414, %v415
        %v417 = vand.u32 2147483647, %v412
        %v418 = vsub.f32 0.0, %v417
        %v419 = vmul.f32 %v418, 1.442695
        %v420 = vpow.pop %v419
        %v421 = vadd.f32 %v420, 1.0
        %v422 = vlog2.pop %v421
        %v423 = vmul.f32 %v422, 0.6931472
        %v424 = vadd.f32 %v416, %v423
        %vm425 = vcmask 122880
        %v426 = vsel %vm425, %v424, 0.0
        %427 = vadd.xlane.f32.xlu0 %v426
        %v428 = vpop.xlane.xlu0 %427
        %v429 = vrot.slane %v428, 4
        %v430 = vadd.f32 %v428, %v429
        %v431 = vrot.slane %v430, 2
        %v432 = vadd.f32 %v430, %v431
        %v433 = vrot.slane %v432, 1
        %v434 = vadd.f32 %v432, %v433
        %s435 = vtos %v434
        %v436 = vlaneseq
        %v437 = vand.u32 %v436, 127
        %vm438 = vcmp.eq.s32.totalorder %v437, 8
        %v439 = vstv %s435
        %v440 = vsel %vm438, %v439, 0.0
        %vm441 = vcmp.eq.s32.totalorder %v437, 0
        %v442 = vsel %vm441, %v347, %v440
        %vm443 = vcmp.eq.s32.totalorder %v437, 1
        %v444 = vsel %vm443, %v383, %v442
        %vm445 = vcmp.eq.s32.totalorder %v437, 2
        %v446 = vsel %vm445, %v367, %v444
        %vm447 = vcmp.eq.s32.totalorder %v437, 3
        %v448 = vsel %vm447, %v402, %v446
        %vm449 = vcmp.eq.s32.totalorder %v437, 4
        %v450 = vsel %vm449, %v352, %v448
        %vm451 = vcmp.eq.s32.totalorder %v437, 5
        %v452 = vsel %vm451, %v388, %v450
        %vm453 = vcmp.eq.s32.totalorder %v437, 6
        %v454 = vsel %vm453, %v376, %v452
        %vm455 = vcmp.eq.s32.totalorder %v437, 7
        %v456 = vsel %vm455, %v411, %v454
        %457 = vst [vmem:[%s332] sm:$0xf] %v456
        %s458 = sand.u32 %s163, 1
        %s459 = scalar_lea.sflag [#allocation4], %s458
        %s460 = sand.u32 %s163, 1
        %s461 = smul.addr %s460, 4
        %s462 = scalar_lea.vmem [#allocation8], %s461
        // Predicated region
        $region53: #{tpu_custom_call.1} parent=39 // pred_check
          %p463 = pneg %p173
        $region54: #{tpu_custom_call.1} parent=39 // pred_check_branch
          %465 = sbr.rel (%p463) target = $region56
        $region55: #{tpu_custom_call.1} parent=39 // pred_region
          %s467 = ssub.s32 64, 64
          %468 = vsyncadd %s459, %s467
          %s469 = smul.addr %s25, 64
          %s470 = scalar_lea.hbm %s5, %s469
          %s472 = sshll.u32 %s462, 4
          %s473 = int_to_ptr.vmem [resolvable:$true] %s472
          %475 = dma.vmem_to_hbm [thread:$0]  %s473, 64, %s470, %s459
        $region56: #{tpu_custom_call.1} parent=39 // pred_fallthru
          _
      $region40: #{tpu_custom_call.1} parent=5 // pred_fallthru
        _
      %p476 = scmp.le.s32.totalorder 2, %s20
      // Predicated region
      $region57: #{tpu_custom_call.1} parent=5 // pred_check
        %p477 = pneg %p476
      $region58: #{tpu_custom_call.1} parent=5 // pred_check_branch
        %479 = sbr.rel (%p477) target = $region60
      $region59: #{tpu_custom_call.1} parent=5 // pred_region
        %s480 = ssub.s32 %s20, 2
        // Predicated region
        $region61: #{tpu_custom_call.1} parent=59 // pred_check
          %p481 = pneg %p179
        $region62: #{tpu_custom_call.1} parent=59 // pred_check_branch
          %483 = sbr.rel (%p481) target = $region64
        $region63: #{tpu_custom_call.1} parent=59 // pred_region
          %s484 = sand.u32 %s164, 1
          %s485 = scalar_lea.sflag [#allocation4], %s484
          %s486 = sand.u32 %s164, 1
          %s487 = smul.addr %s486, 4
          %s488 = scalar_lea.vmem [#allocation8], %s487
          %489 = dma.done %s485, 64
        $region64: #{tpu_custom_call.1} parent=59 // pred_fallthru
          _
      $region60: #{tpu_custom_call.1} parent=5 // pred_fallthru
        _
    $region6: #{tpu_custom_call.1} parent=1 // loop_footer
      %s24 = sadd.s32 1, %s20
    $region7: #{tpu_custom_call.1} parent=1 // loop_footer_branch
      %19 = sbr.rel target = $region3
    $region8: #{tpu_custom_call.1} parent=1 // loop_exit
      _
    %490 = vsyncpa [#allocation3], 1
    %s491 = scalar_lea.sflag [#allocation3], 1
    %492 = vsyncpa %s491, 1
    %493 = vsyncpa [#allocation6], 1
    %s494 = scalar_lea.sflag [#allocation6], 1
    %495 = vsyncpa %s494, 1
    %496 = vsyncpa [#allocation4], 1
    %s497 = scalar_lea.sflag [#allocation4], 1
    %498 = vsyncpa %s497, 1

</llo_original>
